<compile_context>
chip_gen: v7x
topology: tpu7x:2x2x1
jax: 0.10.0
libtpu: 0.0.40
codegen_flags: <defaults>
</compile_context>

<pallas_src>
import jax
import jax.numpy as jnp
from jax import lax
from jax.experimental import pallas as pl
from jax.experimental.pallas import tpu as pltpu

# Contract the last dim of the LHS with the last dim of the RHS (NT layout).
_NT = (((1,), (1,)), ((), ()))


def _make_kernel(scaling_rank):
    def kernel(x_ref, w_ref, ma_ref, mb_ref, xa_ref, lb_ref, b_ref,
               o_ref, acc_ref):
        k = pl.program_id(2)

        @pl.when(k == 0)
        def _init():
            # Bias folded into accumulator init (saves one (tm, tn) add pass
            # and an un-CSE'd broadcast in finalize).
            acc_ref[...] = jnp.broadcast_to(
                b_ref[...].astype(jnp.float32), acc_ref.shape)

        # Multiplicative LoRA scale: scaling_rank is tiny (1-2), so build it
        # as VPU broadcast outer-product sums instead of a K=scaling_rank MXU
        # matmul (which would drain a (tn, tk) result through the MRF and
        # contend with the main vmatmul pushes).
        mb = mb_ref[...].astype(jnp.float32)          # (tn, sr), 1/sr pre-folded
        ma = ma_ref[...].astype(jnp.float32)          # (sr, tk)
        scale = mb[:, 0:1] * ma[0:1, :]
        for r in range(1, scaling_rank):
            scale = scale + mb[:, r:r + 1] * ma[r:r + 1, :]

        eff_w = (w_ref[...] * scale).astype(x_ref.dtype)           # (tn, tk)

        # Single accumulator read-modify-write per grid step.
        acc_ref[...] += lax.dot_general(x_ref[...], eff_w, _NT,
                                        preferred_element_type=jnp.float32)

        @pl.when(k == pl.num_programs(2) - 1)
        def _finalize():
            # Additive LoRA, hoisted out of the k loop: xa = x @ lora_a.T is
            # precomputed in the wrapper; only the rank-sized expansion runs
            # here, once per (i, j) output tile.
            add = lax.dot_general(xa_ref[...],
                                  lb_ref[...].astype(jnp.float32), _NT,
                                  preferred_element_type=jnp.float32)
            o_ref[...] = (acc_ref[...] + add).astype(o_ref.dtype)

    return kernel


def _pick_tile(dim, pref, align):
    """Largest `align`-multiple divisor of `dim` that is <= pref.

    Falls back to the full dimension only when no aligned divisor exists
    (block == full array is always a legal block shape)."""
    if dim <= pref:
        return dim
    t = (pref // align) * align
    while t >= align:
        if dim % t == 0:
            return t
        t -= align
    return dim


def _vmem_estimate(tm, tn, tk, rank, scaling_rank, in_b, w_b, out_b):
    small = (scaling_rank * tk + tn * scaling_rank
             + tm * rank + tn * rank + tn) * 4
    return (2 * (tm * tk * in_b + tn * tk * w_b)    # double-buffered x, W
            + 2 * tm * tn * out_b                   # double-buffered output
            + tm * tn * 4                           # f32 accumulator
            + 2 * small)                            # small LoRA / bias tiles


def lora_linear(x, weight, bias, lora_a, lora_b, multi_lora_a, multi_lora_b,
                *, rank, scaling_rank, tm=1024, tn=256, tk=512,
                compute_dtype=None):
    """x: (batch, seq, in_features) -> (batch, seq, out_features)."""
    # TODO(synk): the scaling_rank==1 && rank==0 shortcut branch (elementwise
    # scale before/after the base linear) and the rank==0 / scaling_rank==0
    # variants of the general branch are not implemented in this kernel.
    assert rank > 0 and scaling_rank > 0, "general forward branch only"
    batch, seq, in_f = x.shape
    out_f = weight.shape[0]
    tokens = batch * seq
    out_dtype = x.dtype
    cdt = jnp.dtype(compute_dtype) if compute_dtype is not None else x.dtype

    x2d = x.reshape(tokens, in_f).astype(cdt)
    w_c = weight.astype(cdt)
    if bias is None:
        bias = jnp.zeros((out_f,), jnp.float32)
    bias2d = bias.reshape(1, out_f)

    # Fold constant divides into the small LoRA factors once (wrapper).
    mb_s = multi_lora_b.astype(jnp.float32) / float(scaling_rank)
    lb_s = lora_b.astype(jnp.float32) / float(rank)

    # Additive-LoRA projection hoisted out of the kernel's k loop: one tiny
    # (tokens, rank) matmul done by XLA, f32 result.
    xa = lax.dot_general(x2d, lora_a.astype(cdt), _NT,
                         preferred_element_type=jnp.float32)

    # --- Tile selection --------------------------------------------------
    tm = _pick_tile(tokens, tm, 8)
    tn = _pick_tile(out_f, tn, 128)     # lane-dense output tiles
    tk = _pick_tile(in_f, tk, 128)

    in_b = cdt.itemsize
    w_b = cdt.itemsize
    out_b = jnp.dtype(out_dtype).itemsize
    budget = 44 * 1024 * 1024           # fits v7x 64 MiB physical with headroom
    for _ in range(12):
        if _vmem_estimate(tm, tn, tk, rank, scaling_rank,
                          in_b, w_b, out_b) <= budget:
            break
        nk = _pick_tile(in_f, max(tk // 2, 128), 128)
        nm = _pick_tile(tokens, max(tm // 2, 128), 8)
        nn_ = _pick_tile(out_f, max(tn // 2, 128), 128)
        if nk < tk:
            tk = nk
        elif nm < tm:
            tm = nm
        elif nn_ < tn:
            tn = nn_
        else:
            break

    # v7x has 2 TensorCores; keep >= 2 blocks on the parallel i axis when
    # there are enough tokens so both cores get work (neutral on v5e/v6e).
    if tokens >= 512 and tokens // tm < 2:
        nm = _pick_tile(tokens, tm // 2, 8)
        if nm < tm:
            tm = nm

    est = _vmem_estimate(tm, tn, tk, rank, scaling_rank, in_b, w_b, out_b)
    vmem_limit = int(max(est + (4 << 20), 32 << 20))

    grid = (tokens // tm, out_f // tn, in_f // tk)

    out = pl.pallas_call(
        _make_kernel(scaling_rank),
        out_shape=jax.ShapeDtypeStruct((tokens, out_f), out_dtype),
        grid_spec=pltpu.PrefetchScalarGridSpec(
            num_scalar_prefetch=0,
            grid=grid,
            in_specs=[
                pl.BlockSpec((tm, tk), lambda i, j, k: (i, k)),            # x
                pl.BlockSpec((tn, tk), lambda i, j, k: (j, k)),            # W
                pl.BlockSpec((scaling_rank, tk), lambda i, j, k: (0, k)),  # multi_lora_a
                pl.BlockSpec((tn, scaling_rank), lambda i, j, k: (j, 0)),  # multi_lora_b / sr
                pl.BlockSpec((tm, rank), lambda i, j, k: (i, 0)),          # xa = x @ lora_a.T
                pl.BlockSpec((tn, rank), lambda i, j, k: (j, 0)),          # lora_b / rank
                pl.BlockSpec((1, tn), lambda i, j, k: (0, j)),             # bias
            ],
            out_specs=pl.BlockSpec((tm, tn), lambda i, j, k: (i, j)),
            scratch_shapes=[pltpu.VMEM((tm, tn), jnp.float32)],
        ),
        compiler_params=pltpu.CompilerParams(
            dimension_semantics=("parallel", "parallel", "arbitrary"),
            vmem_limit_bytes=vmem_limit),
    )(x2d, w_c, multi_lora_a, mb_s, xa, lb_s, bias2d)
    return out.reshape(batch, seq, out_f)


def _reference(x, weight, bias, lora_a, lora_b, multi_lora_a, multi_lora_b,
               *, rank, scaling_rank):
    hp = lax.Precision.HIGHEST
    w = weight * jnp.einsum("or,ri->oi", multi_lora_b, multi_lora_a,
                            precision=hp) / scaling_rank
    w = w + jnp.einsum("or,ri->oi", lora_b, lora_a, precision=hp) / rank
    return jnp.einsum("bsi,oi->bso", x, w, precision=hp) + bias


if __name__ == "__main__":
    key = jax.random.PRNGKey(0)

    def make_params(k, in_f, out_f, rank, sr, init_scale):
        ks = jax.random.split(k, 6)
        weight = jax.random.normal(ks[0], (out_f, in_f), jnp.float32) * 0.1
        bias = jax.random.normal(ks[1], (out_f,), jnp.float32) * 0.1
        # LoRA params (__init__ semantics, init_scale < 0 path).
        la = jax.random.normal(ks[2], (rank, in_f), jnp.float32) * init_scale
        lb = jax.random.normal(ks[3], (out_f, rank), jnp.float32) * init_scale
        mla = (jnp.ones((sr, in_f), jnp.float32)
               + jax.random.normal(ks[4], (sr, in_f), jnp.float32) * init_scale)
        mlb = (jnp.ones((out_f, sr), jnp.float32)
               + jax.random.normal(ks[5], (out_f, sr), jnp.float32) * init_scale)
        return weight, bias, la, lb, mla, mlb

    k1, k2, k3, k4 = jax.random.split(key, 4)

    # --- Test 1: tiny single-block configuration -------------------------
    batch, seq, in_f, out_f, rank, sr = 2, 8, 32, 32, 4, 2
    w, b, la, lb, mla, mlb = make_params(k1, in_f, out_f, rank, sr, -0.05)
    x = jax.random.normal(k2, (batch, seq, in_f), jnp.float32)

    y = lora_linear(x, w, b, la, lb, mla, mlb, rank=rank, scaling_rank=sr)
    y = jax.block_until_ready(y)
    y_ref = _reference(x, w, b, la, lb, mla, mlb, rank=rank, scaling_rank=sr)
    assert jnp.allclose(y, y_ref, atol=5e-3, rtol=5e-3), "test1 mismatch"

    # --- Test 2: multi-block grid (k > 1), non-divisible out_features ----
    batch, seq, in_f, out_f, rank, sr = 2, 128, 768, 320, 8, 2
    w, b, la, lb, mla, mlb = make_params(k3, in_f, out_f, rank, sr, -0.05)
    x = jax.random.normal(k4, (batch, seq, in_f), jnp.float32)

    y = lora_linear(x, w, b, la, lb, mla, mlb, rank=rank, scaling_rank=sr,
                    tm=128, tn=256, tk=256)   # grid (2, 1, 3); tn falls back to full 320
    y = jax.block_until_ready(y)
    y_ref = _reference(x, w, b, la, lb, mla, mlb, rank=rank, scaling_rank=sr)
    assert jnp.allclose(y, y_ref, atol=2e-2, rtol=2e-2), "test2 mismatch"

    # bf16 compute path (perf configuration), f32 accumulation, loose tol.
    y_bf = lora_linear(x, w, b, la, lb, mla, mlb, rank=rank, scaling_rank=sr,
                       tm=128, tn=256, tk=256, compute_dtype=jnp.bfloat16)
    y_bf = jax.block_until_ready(y_bf)
    assert jnp.allclose(y_bf, y_ref, atol=2e-1, rtol=6e-2), "bf16 mismatch"

    print("KERNEL_OK")
</pallas_src>

<mosaic_0001>
module attributes {stable_mosaic.version = 11 : i64} {
  func.func @kernel(%arg0: i32, %arg1: i32, %arg2: i32, %arg3: memref<16x32xf32, #tpu.memory_space<vmem>>, %arg4: memref<32x32xf32, #tpu.memory_space<vmem>>, %arg5: memref<2x32xf32, #tpu.memory_space<vmem>>, %arg6: memref<32x2xf32, #tpu.memory_space<vmem>>, %arg7: memref<16x4xf32, #tpu.memory_space<vmem>>, %arg8: memref<32x4xf32, #tpu.memory_space<vmem>>, %arg9: memref<1x32xf32, #tpu.memory_space<vmem>>, %arg10: memref<16x32xf32, #tpu.memory_space<vmem>>, %arg11: memref<16x32xf32, #tpu.memory_space<vmem>>) attributes {dimension_semantics = [#tpu.dimension_semantics<parallel>, #tpu.dimension_semantics<parallel>, #tpu.dimension_semantics<arbitrary>], iteration_bounds = array<i64: 1, 1, 1>, scalar_prefetch = 0 : i64, scratch_operands = 1 : i64, tpu.core_type = #tpu.core_type<tc>, window_params = [{transform_indices = @transform_0, window_bounds = array<i64: 16, 32>}, {transform_indices = @transform_1, window_bounds = array<i64: 32, 32>}, {transform_indices = @transform_2, window_bounds = array<i64: 2, 32>}, {transform_indices = @transform_3, window_bounds = array<i64: 32, 2>}, {transform_indices = @transform_4, window_bounds = array<i64: 16, 4>}, {transform_indices = @transform_5, window_bounds = array<i64: 32, 4>}, {transform_indices = @transform_6, window_bounds = array<i64: 1, 32>}, {transform_indices = @transform_7, window_bounds = array<i64: 16, 32>}]} {
    %c0_i32 = arith.constant 0 : i32
    %0 = arith.cmpi eq, %arg2, %c0_i32 : i32
    %1 = arith.extui %0 : i1 to i32
    %c0_i32_0 = arith.constant 0 : i32
    %2 = arith.cmpi ne, %1, %c0_i32_0 : i32
    scf.if %2 {
      %c0_14 = arith.constant 0 : index
      %c0_15 = arith.constant 0 : index
      %26 = vector.load %arg9[%c0_14, %c0_15] : memref<1x32xf32, #tpu.memory_space<vmem>>, vector<1x32xf32>
      %27 = vector.shape_cast %26 : vector<1x32xf32> to vector<1x32xf32>
      %28 = vector.broadcast %27 : vector<1x32xf32> to vector<16x32xf32>
      %c0_16 = arith.constant 0 : index
      %c0_17 = arith.constant 0 : index
      %29 = vector.load %arg11[%c0_16, %c0_17] : memref<16x32xf32, #tpu.memory_space<vmem>>, vector<16x32xf32>
      tpu.vector_store %arg11[%c0_16, %c0_17], %28 {strides = array<i32>} : memref<16x32xf32, #tpu.memory_space<vmem>>, vector<16x32xf32>,
    } else {
    }
    %c0 = arith.constant 0 : index
    %c0_1 = arith.constant 0 : index
    %3 = vector.load %arg6[%c0, %c0_1] : memref<32x2xf32, #tpu.memory_space<vmem>>, vector<32x2xf32>
    %c0_2 = arith.constant 0 : index
    %c0_3 = arith.constant 0 : index
    %4 = vector.load %arg5[%c0_2, %c0_3] : memref<2x32xf32, #tpu.memory_space<vmem>>, vector<2x32xf32>
    %5 = vector.extract_strided_slice %3 {offsets = [0, 0], sizes = [32, 1], strides = [1, 1]} : vector<32x2xf32> to vector<32x1xf32>
    %6 = vector.extract_strided_slice %4 {offsets = [0, 0], sizes = [1, 32], strides = [1, 1]} : vector<2x32xf32> to vector<1x32xf32>
    %7 = vector.broadcast %5 : vector<32x1xf32> to vector<32x32xf32>
    %8 = vector.broadcast %6 : vector<1x32xf32> to vector<32x32xf32>
    %9 = arith.mulf %7, %8 : vector<32x32xf32>
    %10 = vector.extract_strided_slice %3 {offsets = [0, 1], sizes = [32, 1], strides = [1, 1]} : vector<32x2xf32> to vector<32x1xf32>
    %11 = vector.extract_strided_slice %4 {offsets = [1, 0], sizes = [1, 32], strides = [1, 1]} : vector<2x32xf32> to vector<1x32xf32>
    %12 = vector.broadcast %10 : vector<32x1xf32> to vector<32x32xf32>
    %13 = vector.broadcast %11 : vector<1x32xf32> to vector<32x32xf32>
    %14 = arith.mulf %12, %13 : vector<32x32xf32>
    %15 = arith.addf %9, %14 : vector<32x32xf32>
    %c0_4 = arith.constant 0 : index
    %c0_5 = arith.constant 0 : index
    %16 = vector.load %arg4[%c0_4, %c0_5] : memref<32x32xf32, #tpu.memory_space<vmem>>, vector<32x32xf32>
    %17 = arith.mulf %16, %15 : vector<32x32xf32>
    %c0_6 = arith.constant 0 : index
    %c0_7 = arith.constant 0 : index
    %18 = vector.load %arg11[%c0_6, %c0_7] : memref<16x32xf32, #tpu.memory_space<vmem>>, vector<16x32xf32>
    %c0_8 = arith.constant 0 : index
    %c0_9 = arith.constant 0 : index
    %19 = vector.load %arg3[%c0_8, %c0_9] : memref<16x32xf32, #tpu.memory_space<vmem>>, vector<16x32xf32>
    %cst = arith.constant dense<0.000000e+00> : vector<16x32xf32>
    %20 = tpu.matmul %19, %17, %cst {dimension_numbers = #tpu.dot_dimension_numbers<[1], [1], [0], [0], [0, 0, 1, 0], [], []>} : vector<16x32xf32>, vector<32x32xf32>, vector<16x32xf32> -> vector<16x32xf32>
    %21 = arith.addf %18, %20 : vector<16x32xf32>
    %c0_10 = arith.constant 0 : index
    %c0_11 = arith.constant 0 : index
    %22 = vector.load %arg11[%c0_10, %c0_11] : memref<16x32xf32, #tpu.memory_space<vmem>>, vector<16x32xf32>
    tpu.vector_store %arg11[%c0_10, %c0_11], %21 {strides = array<i32>} : memref<16x32xf32, #tpu.memory_space<vmem>>, vector<16x32xf32>,
    %c0_i32_12 = arith.constant 0 : i32
    %23 = arith.cmpi eq, %arg2, %c0_i32_12 : i32
    %24 = arith.extui %23 : i1 to i32
    %c0_i32_13 = arith.constant 0 : i32
    %25 = arith.cmpi ne, %24, %c0_i32_13 : i32
    scf.if %25 {
      %c0_14 = arith.constant 0 : index
      %c0_15 = arith.constant 0 : index
      %26 = vector.load %arg7[%c0_14, %c0_15] : memref<16x4xf32, #tpu.memory_space<vmem>>, vector<16x4xf32>
      %c0_16 = arith.constant 0 : index
      %c0_17 = arith.constant 0 : index
      %27 = vector.load %arg8[%c0_16, %c0_17] : memref<32x4xf32, #tpu.memory_space<vmem>>, vector<32x4xf32>
      %cst_18 = arith.constant dense<0.000000e+00> : vector<16x32xf32>
      %28 = tpu.matmul %26, %27, %cst_18 {dimension_numbers = #tpu.dot_dimension_numbers<[1], [1], [0], [0], [0, 0, 1, 0], [], []>} : vector<16x4xf32>, vector<32x4xf32>, vector<16x32xf32> -> vector<16x32xf32>
      %c0_19 = arith.constant 0 : index
      %c0_20 = arith.constant 0 : index
      %29 = vector.load %arg11[%c0_19, %c0_20] : memref<16x32xf32, #tpu.memory_space<vmem>>, vector<16x32xf32>
      %30 = arith.addf %29, %28 : vector<16x32xf32>
      %c0_21 = arith.constant 0 : index
      %c0_22 = arith.constant 0 : index
      %31 = vector.load %arg10[%c0_21, %c0_22] : memref<16x32xf32, #tpu.memory_space<vmem>>, vector<16x32xf32>
      tpu.vector_store %arg10[%c0_21, %c0_22], %30 {strides = array<i32>} : memref<16x32xf32, #tpu.memory_space<vmem>>, vector<16x32xf32>,
    } else {
    }
    return
  }
  func.func @transform_0(%arg0: i32, %arg1: i32, %arg2: i32) -> (i32, i32) {
    %c0_i32 = arith.constant 0 : i32
    return %arg0, %arg2 : i32, i32
  }
  func.func @transform_1(%arg0: i32, %arg1: i32, %arg2: i32) -> (i32, i32) {
    %c0_i32 = arith.constant 0 : i32
    return %arg1, %arg2 : i32, i32
  }
  func.func @transform_2(%arg0: i32, %arg1: i32, %arg2: i32) -> (i32, i32) {
    %c0_i32 = arith.constant 0 : i32
    %c0_i32_0 = arith.constant 0 : i32
    return %c0_i32, %arg2 : i32, i32
  }
  func.func @transform_3(%arg0: i32, %arg1: i32, %arg2: i32) -> (i32, i32) {
    %c0_i32 = arith.constant 0 : i32
    %c0_i32_0 = arith.constant 0 : i32
    return %arg1, %c0_i32 : i32, i32
  }
  func.func @transform_4(%arg0: i32, %arg1: i32, %arg2: i32) -> (i32, i32) {
    %c0_i32 = arith.constant 0 : i32
    %c0_i32_0 = arith.constant 0 : i32
    return %arg0, %c0_i32 : i32, i32
  }
  func.func @transform_5(%arg0: i32, %arg1: i32, %arg2: i32) -> (i32, i32) {
    %c0_i32 = arith.constant 0 : i32
    %c0_i32_0 = arith.constant 0 : i32
    return %arg1, %c0_i32 : i32, i32
  }
  func.func @transform_6(%arg0: i32, %arg1: i32, %arg2: i32) -> (i32, i32) {
    %c0_i32 = arith.constant 0 : i32
    %c0_i32_0 = arith.constant 0 : i32
    return %c0_i32, %arg1 : i32, i32
  }
  func.func @transform_7(%arg0: i32, %arg1: i32, %arg2: i32) -> (i32, i32) {
    %c0_i32 = arith.constant 0 : i32
    return %arg0, %arg1 : i32, i32
  }
}

</mosaic_0001>

<llo_original>
// kernel: tpu_custom_call.1
$region0: #{tpu_custom_call.1}
  #allocation0 [shape = 'u32[]', space=smem, size = 0x4, offset = 0x4, fixed_abs, tag = 'smem constant byte address 0x4 - core index']
  #allocation1 [shape = 'u32[144,128]{1,0:T(1,128)}', space=vmem, size = 0x12000, scoped, tag = 'internal scratch']
  #allocation2 [shape = 'f32[16,32]{1,0:T(8,128)}', space=vmem, size = 0x2000, scoped, tag = 'scratch operand']
  %s0 = inlined_call_operand.vmem [shape: f32[16,32], index: 0, kind: input, shape index: {}]
  %s1 = inlined_call_operand.vmem [shape: f32[32,32], index: 1, kind: input, shape index: {}]
  %s2 = inlined_call_operand.vmem [shape: f32[2,32], index: 2, kind: input, shape index: {}]
  %s3 = inlined_call_operand.vmem [shape: f32[32,2], index: 3, kind: input, shape index: {}]
  %s4 = inlined_call_operand.vmem [shape: f32[16,4], index: 4, kind: input, shape index: {}]
  %s5 = inlined_call_operand.vmem [shape: f32[32,4], index: 5, kind: input, shape index: {}]
  %s6 = inlined_call_operand.vmem [shape: f32[1,32], index: 6, kind: input, shape index: {}]
  %s7 = inlined_call_operand.hbm [shape: f32[16,32], index: 7, kind: output, shape index: {}]
  %s8 = sld [smem:[#allocation0]]
  $region46: #{tpu_custom_call.1} parent=0
    _
  %s10 = ssub.s32 1, %s8
  %s11 = scalar_select 0, %s10, %s8
  $region1: #{tpu_custom_call.1} parent=0
    #allocation3 [shape = 'u8[8192]{0}', space=vmem, size = 0x2000, scoped, tag = 'output window, operand 0, single buffered']
    #allocation4 [shape = 's32[1]{0}', space=sflag, size = 0x4, scoped, tag = 'scoped memory for tpu_custom_call.1']
    %12 = vsyncpa [#allocation4], 0
    // Predicated region
    $region2: #{tpu_custom_call.1} parent=1 // pred_check
      _
    $region3: #{tpu_custom_call.1} parent=1 // pred_check_branch
      %14 = sbr.rel (0) target = $region5
    $region4: #{tpu_custom_call.1} parent=1 // pred_region
      _
    $region5: #{tpu_custom_call.1} parent=1 // pred_fallthru
      _
    // Predicated region
    $region6: #{tpu_custom_call.1} parent=1 // pred_check
      _
    $region7: #{tpu_custom_call.1} parent=1 // pred_check_branch
      %16 = sbr.rel (0) target = $region9
    $region8: #{tpu_custom_call.1} parent=1 // pred_region
      _
    $region9: #{tpu_custom_call.1} parent=1 // pred_fallthru
      _
    // Predicated region
    $region10: #{tpu_custom_call.1} parent=1 // pred_check
      _
    $region11: #{tpu_custom_call.1} parent=1 // pred_check_branch
      %18 = sbr.rel (0) target = $region13
    $region12: #{tpu_custom_call.1} parent=1 // pred_region
      _
    $region13: #{tpu_custom_call.1} parent=1 // pred_fallthru
      _
    // Predicated region
    $region14: #{tpu_custom_call.1} parent=1 // pred_check
      _
    $region15: #{tpu_custom_call.1} parent=1 // pred_check_branch
      %20 = sbr.rel (0) target = $region17
    $region16: #{tpu_custom_call.1} parent=1 // pred_region
      _
    $region17: #{tpu_custom_call.1} parent=1 // pred_fallthru
      _
    // Predicated region
    $region18: #{tpu_custom_call.1} parent=1 // pred_check
      _
    $region19: #{tpu_custom_call.1} parent=1 // pred_check_branch
      %22 = sbr.rel (0) target = $region21
    $region20: #{tpu_custom_call.1} parent=1 // pred_region
      _
    $region21: #{tpu_custom_call.1} parent=1 // pred_fallthru
      _
    // Predicated region
    $region22: #{tpu_custom_call.1} parent=1 // pred_check
      _
    $region23: #{tpu_custom_call.1} parent=1 // pred_check_branch
      %24 = sbr.rel (0) target = $region25
    $region24: #{tpu_custom_call.1} parent=1 // pred_region
      _
    $region25: #{tpu_custom_call.1} parent=1 // pred_fallthru
      _
    // Predicated region
    $region26: #{tpu_custom_call.1} parent=1 // pred_check
      _
    $region27: #{tpu_custom_call.1} parent=1 // pred_check_branch
      %26 = sbr.rel (0) target = $region29
    $region28: #{tpu_custom_call.1} parent=1 // pred_region
      _
    $region29: #{tpu_custom_call.1} parent=1 // pred_fallthru
      _
    %p27 = scmp.eq.s32.totalorder 0, 0
    // Predicated region
    $region30: #{tpu_custom_call.1} parent=1 // pred_check
      %p28 = pneg %p27
    $region31: #{tpu_custom_call.1} parent=1 // pred_check_branch
      %30 = sbr.rel (%p28) target = $region33
    $region32: #{tpu_custom_call.1} parent=1 // pred_region
      %v31 = vld [vmem:[%s6] sm:$0x1]
      %v33 = vlaneseq
      %v34 = vshrl.u32 %v33, 7
      %v35 = vsub.s32 0, %v34
      %v36 = vrot.slane %v31, %v35
      %vm38 = vcmask 261120
      %39 = vst.msk [vmem:[#allocation2] sm:$0xff] %vm38, %v36
      %40 = vst.msk [vmem:[#allocation2 + $0x8] sm:$0xff] %vm38, %v36
    $region33: #{tpu_custom_call.1} parent=1 // pred_fallthru
      _
    %v41 = vld [vmem:[%s3] sm:$0xff]
    %v42 = vld [vmem:[%s3 + $0x8] sm:$0xff]
    %v43 = vld [vmem:[%s3 + $0x10] sm:$0xff]
    %v44 = vld [vmem:[%s3 + $0x18] sm:$0xff]
    %v45 = vld [vmem:[%s2] sm:$0x3]
    %47 = vset.pattern.permute.xlu0 0
    %48 = vperm.xlu0 %47, %v41
    %v49 = vpop.permute.xlu0 %48
    %52 = vset.pattern.permute.xlu0 0
    %53 = vperm.xlu0 %52, %v42
    %v54 = vpop.permute.xlu0 %53
    %57 = vset.pattern.permute.xlu0 0
    %58 = vperm.xlu0 %57, %v43
    %v59 = vpop.permute.xlu0 %58
    %62 = vset.pattern.permute.xlu0 0
    %63 = vperm.xlu0 %62, %v44
    %v64 = vpop.permute.xlu0 %63
    %v66 = vlaneseq
    %v67 = vshrl.u32 %v66, 7
    %v68 = vsub.s32 0, %v67
    %v69 = vrot.slane %v45, %v68
    %v70 = vmul.f32 %v49, %v69
    %v71 = vmul.f32 %v54, %v69
    %v72 = vmul.f32 %v59, %v69
    %v73 = vmul.f32 %v64, %v69
    %74 = vset.pattern.permute.xlu0 1
    %75 = vperm.xlu0 %74, %v41
    %v76 = vpop.permute.xlu0 %75
    %78 = vset.pattern.permute.xlu0 1
    %79 = vperm.xlu0 %78, %v42
    %v80 = vpop.permute.xlu0 %79
    %82 = vset.pattern.permute.xlu0 1
    %83 = vperm.xlu0 %82, %v43
    %v84 = vpop.permute.xlu0 %83
    %86 = vset.pattern.permute.xlu0 1
    %87 = vperm.xlu0 %86, %v44
    %v88 = vpop.permute.xlu0 %87
    %v90 = vlaneseq
    %v91 = vshrl.u32 %v90, 7
    %v92 = vsub.s32 1, %v91
    %v93 = vrot.slane %v45, %v92
    %v94 = vmul.f32 %v76, %v93
    %v95 = vmul.f32 %v80, %v93
    %v96 = vmul.f32 %v84, %v93
    %v97 = vmul.f32 %v88, %v93
    %v98 = vadd.f32 %v70, %v94
    %v99 = vadd.f32 %v71, %v95
    %v100 = vadd.f32 %v72, %v96
    %v101 = vadd.f32 %v73, %v97
    %v102 = vld [vmem:[%s1] sm:$0xff]
    %v103 = vld [vmem:[%s1 + $0x8] sm:$0xff]
    %v104 = vld [vmem:[%s1 + $0x10] sm:$0xff]
    %v105 = vld [vmem:[%s1 + $0x18] sm:$0xff]
    %v106 = vmul.f32 %v102, %v98
    %v107 = vmul.f32 %v103, %v99
    %v108 = vmul.f32 %v104, %v100
    %v109 = vmul.f32 %v105, %v101
    %v110 = vld [vmem:[#allocation2] sm:$0xff]
    %v111 = vld [vmem:[#allocation2 + $0x8] sm:$0xff]
    %v112 = vld [vmem:[%s0] sm:$0xff]
    %v113 = vld [vmem:[%s0 + $0x8] sm:$0xff]
    %vm114 = vcmask 261120
    %v116 = vsel %vm114, %v112, 0
    %v119 = vsel %vm114, %v113, 0
    %v122 = vsel %vm114, %v106, 0
    %v125 = vsel %vm114, %v107, 0
    %v128 = vsel %vm114, %v108, 0
    %v131 = vsel %vm114, %v109, 0
    %133 = vmatprep.subr.mxu0 0.0
    %134 = vmatpush1.xpose.msra.mxu0 %v122
    %135 = vmatprep.subr.mxu0 0.0
    %136 = vmatpush1.xpose.msra.mxu0 %v125
    %137 = vmatprep.subr.mxu0 0.0
    %138 = vmatpush1.xpose.msra.mxu0 %v128
    %139 = vmatprep.subr.mxu0 0.0
    %140 = vmatpush1.xpose.msra.mxu0 %v131
    %141 = vmatprep.subr.mxu0 0.0
    %142 = vmatpush1.xpose.msra.mxu0 0.0
    %143 = vmatprep.subr.mxu0 0.0
    %144 = vmatpush1.xpose.msra.mxu0 0.0
    %145 = vmatprep.subr.mxu0 0.0
    %146 = vmatpush1.xpose.msra.mxu0 0.0
    %147 = vmatprep.subr.mxu0 0.0
    %148 = vmatpush1.xpose.msra.mxu0 0.0
    %149 = vmatprep.subr.mxu0 0.0
    %150 = vmatpush1.xpose.msra.mxu0 0.0
    %151 = vmatprep.subr.mxu0 0.0
    %152 = vmatpush1.xpose.msra.mxu0 0.0
    %153 = vmatprep.subr.mxu0 0.0
    %154 = vmatpush1.xpose.msra.mxu0 0.0
    %155 = vmatprep.subr.mxu0 0.0
    %156 = vmatpush1.xpose.msra.mxu0 0.0
    %157 = vmatprep.subr.mxu0 0.0
    %158 = vmatpush1.xpose.msra.mxu0 0.0
    %159 = vmatprep.subr.mxu0 0.0
    %160 = vmatpush1.xpose.msra.mxu0 0.0
    %161 = vmatprep.subr.mxu0 0.0
    %162 = vmatpush1.xpose.msra.mxu0 0.0
    %163 = vmatprep.subr.mxu0 0.0
    %164 = vmatpush1.xpose.msra.mxu0 0.0
    %165 = vmatprep.subr.mxu0 0.0
    %166 = vmatpush1.xpose.msra.mxu0 0.0
    %167 = vmatprep.subr.mxu0 0.0
    %168 = vmatpush1.xpose.msra.mxu0 0.0
    %169 = vmatprep.subr.mxu0 0.0
    %170 = vmatpush1.xpose.msra.mxu0 0.0
    %171 = vmatprep.subr.mxu0 0.0
    %172 = vmatpush1.xpose.msra.mxu0 0.0
    %173 = vmatprep.subr.mxu0 0.0
    %174 = vmatpush1.xpose.msra.mxu0 0.0
    %175 = vmatprep.subr.mxu0 0.0
    %176 = vmatpush1.xpose.msra.mxu0 0.0
    %177 = vmatprep.subr.mxu0 0.0
    %178 = vmatpush1.xpose.msra.mxu0 0.0
    %179 = vmatprep.subr.mxu0 0.0
    %180 = vmatpush1.xpose.msra.mxu0 0.0
    %181 = vmatprep.subr.mxu0 0.0
    %182 = vmatpush1.xpose.msra.mxu0 0.0
    %183 = vmatprep.subr.mxu0 0.0
    %184 = vmatpush1.xpose.msra.mxu0 0.0
    %185 = vmatprep.subr.mxu0 0.0
    %186 = vmatpush1.xpose.msra.mxu0 0.0
    %187 = vmatprep.subr.mxu0 0.0
    %188 = vmatpush1.xpose.msra.mxu0 0.0
    %189 = vmatprep.subr.mxu0 0.0
    %190 = vmatpush1.xpose.msra.mxu0 0.0
    %191 = vmatprep.subr.mxu0 0.0
    %192 = vmatpush1.xpose.msra.mxu0 0.0
    %193 = vmatprep.subr.mxu0 0.0
    %194 = vmatpush1.xpose.msra.mxu0 0.0
    %195 = vmatprep.subr.mxu0 0.0
    %196 = vmatpush1.xpose.msra.mxu0 0.0
    %197 = vmatprep.mubr.f32.mxu0 0.0
    %198 = vmatmul.mubr.f32.gmra.mrb[0].mxu0 %v116
    %v199 = vpop.f32.mrb[0].mxu0
    %v200 = vadd.f32 0.0, %v199
    %v201 = vpop.f32.mrb[0].mxu0
    %202 = vmatprep.mubr.f32.mxu0 0.0
    %203 = vmatmul.mubr.f32.gmra.mrb[0].mxu0 %v119
    %v204 = vpop.f32.mrb[0].mxu0
    %v205 = vadd.f32 0.0, %v204
    %v206 = vpop.f32.mrb[0].mxu0
    %207 = vdwg.mxu0
    %v208 = vadd.f32 %v110, %v200
    %v209 = vadd.f32 %v111, %v205
    %210 = vst.msk [vmem:[#allocation2] sm:$0xff] %vm114, %v208
    %211 = vst.msk [vmem:[#allocation2 + $0x8] sm:$0xff] %vm114, %v209
    // Predicated region
    $region34: #{tpu_custom_call.1} parent=1 // pred_check
      %p212 = pneg %p27
    $region35: #{tpu_custom_call.1} parent=1 // pred_check_branch
      %214 = sbr.rel (%p212) target = $region37
    $region36: #{tpu_custom_call.1} parent=1 // pred_region
      %v215 = vld [vmem:[%s4] sm:$0xff]
      %v216 = vld [vmem:[%s4 + $0x8] sm:$0xff]
      %v217 = vld [vmem:[%s5] sm:$0xff]
      %v218 = vld [vmem:[%s5 + $0x8] sm:$0xff]
      %v219 = vld [vmem:[%s5 + $0x10] sm:$0xff]
      %v220 = vld [vmem:[%s5 + $0x18] sm:$0xff]
      %vm221 = vcmask 31744
      %v223 = vsel %vm221, %v215, 0
      %v226 = vsel %vm221, %v216, 0
      %v229 = vsel %vm221, %v217, 0
      %v232 = vsel %vm221, %v218, 0
      %v235 = vsel %vm221, %v219, 0
      %v238 = vsel %vm221, %v220, 0
      %240 = vmatprep.subr.mxu0 0.0
      %241 = vmatpush1.xpose.msra.mxu0 %v229
      %242 = vmatprep.subr.mxu0 0.0
      %243 = vmatpush1.xpose.msra.mxu0 %v232
      %244 = vmatprep.subr.mxu0 0.0
      %245 = vmatpush1.xpose.msra.mxu0 %v235
      %246 = vmatprep.subr.mxu0 0.0
      %247 = vmatpush1.xpose.msra.mxu0 %v238
      %248 = vmatprep.subr.mxu0 0.0
      %249 = vmatpush1.xpose.msra.mxu0 0.0
      %250 = vmatprep.subr.mxu0 0.0
      %251 = vmatpush1.xpose.msra.mxu0 0.0
      %252 = vmatprep.subr.mxu0 0.0
      %253 = vmatpush1.xpose.msra.mxu0 0.0
      %254 = vmatprep.subr.mxu0 0.0
      %255 = vmatpush1.xpose.msra.mxu0 0.0
      %256 = vmatprep.subr.mxu0 0.0
      %257 = vmatpush1.xpose.msra.mxu0 0.0
      %258 = vmatprep.subr.mxu0 0.0
      %259 = vmatpush1.xpose.msra.mxu0 0.0
      %260 = vmatprep.subr.mxu0 0.0
      %261 = vmatpush1.xpose.msra.mxu0 0.0
      %262 = vmatprep.subr.mxu0 0.0
      %263 = vmatpush1.xpose.msra.mxu0 0.0
      %264 = vmatprep.subr.mxu0 0.0
      %265 = vmatpush1.xpose.msra.mxu0 0.0
      %266 = vmatprep.subr.mxu0 0.0
      %267 = vmatpush1.xpose.msra.mxu0 0.0
      %268 = vmatprep.subr.mxu0 0.0
      %269 = vmatpush1.xpose.msra.mxu0 0.0
      %270 = vmatprep.subr.mxu0 0.0
      %271 = vmatpush1.xpose.msra.mxu0 0.0
      %272 = vmatprep.subr.mxu0 0.0
      %273 = vmatpush1.xpose.msra.mxu0 0.0
      %274 = vmatprep.subr.mxu0 0.0
      %275 = vmatpush1.xpose.msra.mxu0 0.0
      %276 = vmatprep.subr.mxu0 0.0
      %277 = vmatpush1.xpose.msra.mxu0 0.0
      %278 = vmatprep.subr.mxu0 0.0
      %279 = vmatpush1.xpose.msra.mxu0 0.0
      %280 = vmatprep.subr.mxu0 0.0
      %281 = vmatpush1.xpose.msra.mxu0 0.0
      %282 = vmatprep.subr.mxu0 0.0
      %283 = vmatpush1.xpose.msra.mxu0 0.0
      %284 = vmatprep.subr.mxu0 0.0
      %285 = vmatpush1.xpose.msra.mxu0 0.0
      %286 = vmatprep.subr.mxu0 0.0
      %287 = vmatpush1.xpose.msra.mxu0 0.0
      %288 = vmatprep.subr.mxu0 0.0
      %289 = vmatpush1.xpose.msra.mxu0 0.0
      %290 = vmatprep.subr.mxu0 0.0
      %291 = vmatpush1.xpose.msra.mxu0 0.0
      %292 = vmatprep.subr.mxu0 0.0
      %293 = vmatpush1.xpose.msra.mxu0 0.0
      %294 = vmatprep.subr.mxu0 0.0
      %295 = vmatpush1.xpose.msra.mxu0 0.0
      %296 = vmatprep.subr.mxu0 0.0
      %297 = vmatpush1.xpose.msra.mxu0 0.0
      %298 = vmatprep.subr.mxu0 0.0
      %299 = vmatpush1.xpose.msra.mxu0 0.0
      %300 = vmatprep.subr.mxu0 0.0
      %301 = vmatpush1.xpose.msra.mxu0 0.0
      %302 = vmatprep.subr.mxu0 0.0
      %303 = vmatpush1.xpose.msra.mxu0 0.0
      %304 = vmatprep.mubr.f32.mxu0 0.0
      %305 = vmatmul.mubr.f32.gmra.mrb[0].mxu0 %v223
      %v306 = vpop.f32.mrb[0].mxu0
      %v307 = vadd.f32 0.0, %v306
      %v308 = vpop.f32.mrb[0].mxu0
      %309 = vmatprep.mubr.f32.mxu0 0.0
      %310 = vmatmul.mubr.f32.gmra.mrb[0].mxu0 %v226
      %v311 = vpop.f32.mrb[0].mxu0
      %v312 = vadd.f32 0.0, %v311
      %v313 = vpop.f32.mrb[0].mxu0
      %314 = vdwg.mxu0
      %v315 = vld [vmem:[#allocation2] sm:$0xff]
      %v316 = vld [vmem:[#allocation2 + $0x8] sm:$0xff]
      %v317 = vadd.f32 %v315, %v307
      %v318 = vadd.f32 %v316, %v312
      %319 = vst.msk [vmem:[#allocation3] sm:$0xff] %vm114, %v317
      %320 = vst.msk [vmem:[#allocation3 + $0x8] sm:$0xff] %vm114, %v318
    $region37: #{tpu_custom_call.1} parent=1 // pred_fallthru
      _
    // Predicated region
    $region38: #{tpu_custom_call.1} parent=1 // pred_check
      _
    $region39: #{tpu_custom_call.1} parent=1 // pred_check_branch
      %322 = sbr.rel (0) target = $region41
    $region40: #{tpu_custom_call.1} parent=1 // pred_region
      %s324 = ssub.s32 256, 256
      %325 = vsyncadd [#allocation4], %s324
      %s326 = sshll.u32 [#allocation3], 4
      %s327 = int_to_ptr.vmem [resolvable:$true] %s326
      %332 = dma.vmem_to_hbm [thread:$0]  %s327, 256, %s7, [#allocation4], 128, 128, 8
    $region41: #{tpu_custom_call.1} parent=1 // pred_fallthru
      _
    // Predicated region
    $region42: #{tpu_custom_call.1} parent=1 // pred_check
      _
    $region43: #{tpu_custom_call.1} parent=1 // pred_check_branch
      %334 = sbr.rel (0) target = $region45
    $region44: #{tpu_custom_call.1} parent=1 // pred_region
      %335 = dma.done [#allocation4], 256
    $region45: #{tpu_custom_call.1} parent=1 // pred_fallthru
      _
    %336 = vsyncpa [#allocation4], 1

</llo_original>
